<compile_context>
chip_gen: v5e
topology: v5e:2x2
jax: 0.10.0
libtpu: 0.0.40
codegen_flags: <defaults>
</compile_context>

<pallas_src>
import jax
import jax.numpy as jnp
from jax.experimental import pallas as pl
from jax.experimental.pallas import tpu as pltpu

LANE = 128


def _make_kernel(W, vocab_pad, table_dtype):
    """Kernel: vectorized embedding gather (one-hot MXU matmul per window)
    against the pre-projected per-window tables, plus bias."""

    def kernel(ids_ref, tab_ref, bias_ref, o_ref):
        # ids_ref  : VMEM (b_tile, W) int32          (blocked over batch)
        # tab_ref  : VMEM (W, vocab_pad, t_pad)      (resident across grid)
        # bias_ref : VMEM (1, t_pad) float32         (resident across grid)
        # o_ref    : VMEM (b_tile, t_pad) float32    (lane-dense output tile)
        ids = ids_ref[...]                                      # (b_tile, W)
        b_tile = o_ref.shape[0]
        iota_v = jax.lax.broadcasted_iota(jnp.int32, (b_tile, vocab_pad), 1)
        acc = jnp.zeros(o_ref.shape, jnp.float32)
        # W = 2*window+1 is tiny and static -> unrolled loop of MXU matmuls.
        for w in range(W):
            onehot = (iota_v == ids[:, w:w + 1]).astype(table_dtype)
            acc = acc + jnp.dot(onehot, tab_ref[w],
                                preferred_element_type=jnp.float32)
        o_ref[...] = (acc + bias_ref[...]).astype(o_ref.dtype)

    return kernel


def _round_up(x, m):
    return ((x + m - 1) // m) * m


def prepare_params(embedding, w_hidden, b_hidden, w_out, b_out,
                   *, table_dtype=jnp.bfloat16):
    """Call-once preprocessing (hoisted out of the per-call hot path):
      - fuse the two bias-free linears:  Wc = W1^T @ W2^T,  bc = b1 @ W2^T + b2
      - fold Wc into per-window projected embedding tables
      - zero-pad vocab and tag dims to 128 lanes, cast tables to bf16."""
    emb = embedding.astype(jnp.float32)                    # (vocab, E)
    vocab, E = emb.shape
    w1 = w_hidden.astype(jnp.float32).T                    # (W*E, H)
    w2 = w_out.astype(jnp.float32).T                       # (H, T)
    wc = w1 @ w2                                           # (W*E, T)
    bc = b_hidden.astype(jnp.float32) @ w2 + b_out.astype(jnp.float32)  # (T,)

    T = wc.shape[1]
    W = wc.shape[0] // E
    t_pad = _round_up(max(T, 1), LANE)
    vocab_pad = _round_up(vocab, LANE)

    # Per-window projected tables: table[w] = emb @ Wc[w*E:(w+1)*E, :].
    proj = jnp.einsum("ve,wet->wvt", emb, wc.reshape(W, E, T))     # (W,vocab,T)
    table = (jnp.zeros((W, vocab_pad, t_pad), jnp.float32)
             .at[:, :vocab, :T].set(proj)).astype(table_dtype)
    bias = jnp.zeros((1, t_pad), jnp.float32).at[0, :T].set(bc)    # keep f32
    return dict(table=table, bias=bias, W=W, vocab_pad=vocab_pad,
                t_pad=t_pad, T=T)


def nn_tagger_forward(input_ids, prepared, *, b_tile=128):
    """input_ids: (B, W) int; returns (B, 1, tagset_size) float32."""
    table, bias = prepared["table"], prepared["bias"]
    W, vocab_pad = prepared["W"], prepared["vocab_pad"]
    t_pad, T = prepared["t_pad"], prepared["T"]

    B = input_ids.shape[0]
    assert input_ids.shape[1] == W, (input_ids.shape, W)

    # Pad batch to a multiple of b_tile.  Padded rows use token id 0
    # (padding_idx, whose projected rows are zero) and are sliced off below,
    # so they are benign by construction.
    B_pad = _round_up(max(B, 1), b_tile)
    ids = jnp.zeros((B_pad, W), jnp.int32).at[:B].set(input_ids.astype(jnp.int32))

    kernel = _make_kernel(W, vocab_pad, table.dtype)

    out_pad = pl.pallas_call(
        kernel,
        out_shape=jax.ShapeDtypeStruct((B_pad, t_pad), jnp.float32),
        grid=(B_pad // b_tile,),
        in_specs=[
            pl.BlockSpec((b_tile, W), lambda i: (i, 0)),        # ids tile (VMEM)
            pl.BlockSpec(table.shape, lambda i: (0, 0, 0)),     # resident table
            pl.BlockSpec(bias.shape, lambda i: (0, 0)),         # resident bias
        ],
        out_specs=pl.BlockSpec((b_tile, t_pad), lambda i: (i, 0)),
        compiler_params=pltpu.CompilerParams(
            dimension_semantics=("parallel",),      # shard batch tiles across TCs
            vmem_limit_bytes=32 * 1024 * 1024,
        ),
    )(ids, table, bias)

    return out_pad[:B, :T][:, None, :]              # (B, 1, T), matches .unsqueeze(1)


def init_params(key, vocab_size, embedding_dim, window_size, hidden_dim, tagset_size):
    """Deterministic synthetic init mimicking the PyTorch module's shapes/ranges."""
    W = 2 * window_size + 1
    in_features = W * embedding_dim
    k_emb, k_w1, k_b1, k_w2, k_b2 = jax.random.split(key, 5)

    # Embedding: uniform(-0.1, 0.1), padding_idx=0 row zeroed.
    embedding = jax.random.uniform(k_emb, (vocab_size, embedding_dim),
                                   minval=-0.1, maxval=0.1, dtype=jnp.float32)
    embedding = embedding.at[0].set(0.0)

    # nn.Linear default init: U(-1/sqrt(fan_in), 1/sqrt(fan_in))
    bound1 = 1.0 / jnp.sqrt(in_features)
    w_hidden = jax.random.uniform(k_w1, (hidden_dim, in_features),
                                  minval=-bound1, maxval=bound1, dtype=jnp.float32)
    b_hidden = jax.random.uniform(k_b1, (hidden_dim,),
                                  minval=-bound1, maxval=bound1, dtype=jnp.float32)

    bound2 = 1.0 / jnp.sqrt(hidden_dim)
    w_out = jax.random.uniform(k_w2, (tagset_size, hidden_dim),
                               minval=-bound2, maxval=bound2, dtype=jnp.float32)
    b_out = jax.random.uniform(k_b2, (tagset_size,),
                               minval=-bound2, maxval=bound2, dtype=jnp.float32)
    return embedding, w_hidden, b_hidden, w_out, b_out


if __name__ == "__main__":
    vocab_size = 100
    embedding_dim = 16
    window_size = 2              # window W = 5, hidden in_features = 80
    hidden_dim = 32
    tagset_size = 10
    W = 2 * window_size + 1

    key = jax.random.PRNGKey(0)
    k_params, k_ids1, k_ids2 = jax.random.split(key, 3)
    embedding, w_hidden, b_hidden, w_out, b_out = init_params(
        k_params, vocab_size, embedding_dim, window_size, hidden_dim, tagset_size)

    prepared = prepare_params(embedding, w_hidden, b_hidden, w_out, b_out)

    def reference(ids):
        # Pure-JAX reference of the original (unfused) two-linear forward.
        x = jnp.take(embedding, ids, axis=0).reshape(ids.shape[0], -1)
        return (x @ w_hidden.T + b_hidden) @ w_out.T + b_out

    # --- small batch (single grid step) ---
    batch = 8
    ids = jax.random.randint(k_ids1, (batch, W), 1, vocab_size, dtype=jnp.int32)
    out = jax.block_until_ready(nn_tagger_forward(ids, prepared))
    assert out.shape == (batch, 1, tagset_size), out.shape
    ref = reference(ids)
    err = float(jnp.max(jnp.abs(out[:, 0, :] - ref)))
    assert jnp.allclose(out[:, 0, :], ref, atol=5e-3, rtol=5e-2), err

    # --- larger batch (multiple "parallel" grid steps) ---
    batch2 = 300
    ids2 = jax.random.randint(k_ids2, (batch2, W), 1, vocab_size, dtype=jnp.int32)
    out2 = jax.block_until_ready(nn_tagger_forward(ids2, prepared))
    assert out2.shape == (batch2, 1, tagset_size), out2.shape
    ref2 = reference(ids2)
    err2 = float(jnp.max(jnp.abs(out2[:, 0, :] - ref2)))
    assert jnp.allclose(out2[:, 0, :], ref2, atol=5e-3, rtol=5e-2), err2

    print("KERNEL_OK")
</pallas_src>

<mosaic_0001>
module attributes {stable_mosaic.version = 11 : i64} {
  func.func @kernel(%arg0: i32, %arg1: memref<128x5xi32, #tpu.memory_space<vmem>>, %arg2: memref<5x128x128xbf16, #tpu.memory_space<vmem>>, %arg3: memref<1x128xf32, #tpu.memory_space<vmem>>, %arg4: memref<128x128xf32, #tpu.memory_space<vmem>>) attributes {dimension_semantics = [#tpu.dimension_semantics<parallel>], iteration_bounds = array<i64: 1>, scalar_prefetch = 0 : i64, scratch_operands = 0 : i64, tpu.core_type = #tpu.core_type<tc>, window_params = [{transform_indices = @transform_0, window_bounds = array<i64: 128, 5>}, {pipeline_mode = #tpu.pipeline_mode<synchronous>, transform_indices = @transform_1, window_bounds = array<i64: 5, 128, 128>}, {pipeline_mode = #tpu.pipeline_mode<synchronous>, transform_indices = @transform_2, window_bounds = array<i64: 1, 128>}, {transform_indices = @transform_3, window_bounds = array<i64: 128, 128>}]} {
    %c0 = arith.constant 0 : index
    %c0_0 = arith.constant 0 : index
    %0 = vector.load %arg1[%c0, %c0_0] : memref<128x5xi32, #tpu.memory_space<vmem>>, vector<128x5xi32>
    %1 = tpu.iota {dimensions = array<i32: 1>} : vector<128x128xi32>
    %cst = arith.constant 0.000000e+00 : f32
    %2 = vector.broadcast %cst : f32 to vector<128x128xf32>
    %3 = vector.extract_strided_slice %0 {offsets = [0, 0], sizes = [128, 1], strides = [1, 1]} : vector<128x5xi32> to vector<128x1xi32>
    %4 = vector.broadcast %3 : vector<128x1xi32> to vector<128x128xi32>
    %5 = arith.cmpi eq, %1, %4 : vector<128x128xi32>
    %6 = arith.extui %5 : vector<128x128xi1> to vector<128x128xi32>
    %7 = arith.sitofp %6 : vector<128x128xi32> to vector<128x128xf32>
    %8 = arith.truncf %7 : vector<128x128xf32> to vector<128x128xbf16>
    %c0_1 = arith.constant 0 : index
    %c0_2 = arith.constant 0 : index
    %c0_3 = arith.constant 0 : index
    %9 = vector.load %arg2[%c0_1, %c0_2, %c0_3] : memref<5x128x128xbf16, #tpu.memory_space<vmem>>, vector<1x128x128xbf16>
    %10 = vector.shape_cast %9 : vector<1x128x128xbf16> to vector<128x128xbf16>
    %cst_4 = arith.constant dense<0.000000e+00> : vector<128x128xf32>
    %11 = tpu.matmul %8, %10, %cst_4 {dimension_numbers = #tpu.dot_dimension_numbers<[1], [0], [0], [1], [0, 0, 1, 1], [], []>} : vector<128x128xbf16>, vector<128x128xbf16>, vector<128x128xf32> -> vector<128x128xf32>
    %12 = arith.addf %2, %11 : vector<128x128xf32>
    %13 = vector.extract_strided_slice %0 {offsets = [0, 1], sizes = [128, 1], strides = [1, 1]} : vector<128x5xi32> to vector<128x1xi32>
    %14 = vector.broadcast %13 : vector<128x1xi32> to vector<128x128xi32>
    %15 = arith.cmpi eq, %1, %14 : vector<128x128xi32>
    %16 = arith.extui %15 : vector<128x128xi1> to vector<128x128xi32>
    %17 = arith.sitofp %16 : vector<128x128xi32> to vector<128x128xf32>
    %18 = arith.truncf %17 : vector<128x128xf32> to vector<128x128xbf16>
    %c1 = arith.constant 1 : index
    %c0_5 = arith.constant 0 : index
    %c0_6 = arith.constant 0 : index
    %19 = vector.load %arg2[%c1, %c0_5, %c0_6] : memref<5x128x128xbf16, #tpu.memory_space<vmem>>, vector<1x128x128xbf16>
    %20 = vector.shape_cast %19 : vector<1x128x128xbf16> to vector<128x128xbf16>
    %cst_7 = arith.constant dense<0.000000e+00> : vector<128x128xf32>
    %21 = tpu.matmul %18, %20, %cst_7 {dimension_numbers = #tpu.dot_dimension_numbers<[1], [0], [0], [1], [0, 0, 1, 1], [], []>} : vector<128x128xbf16>, vector<128x128xbf16>, vector<128x128xf32> -> vector<128x128xf32>
    %22 = arith.addf %12, %21 : vector<128x128xf32>
    %23 = vector.extract_strided_slice %0 {offsets = [0, 2], sizes = [128, 1], strides = [1, 1]} : vector<128x5xi32> to vector<128x1xi32>
    %24 = vector.broadcast %23 : vector<128x1xi32> to vector<128x128xi32>
    %25 = arith.cmpi eq, %1, %24 : vector<128x128xi32>
    %26 = arith.extui %25 : vector<128x128xi1> to vector<128x128xi32>
    %27 = arith.sitofp %26 : vector<128x128xi32> to vector<128x128xf32>
    %28 = arith.truncf %27 : vector<128x128xf32> to vector<128x128xbf16>
    %c2 = arith.constant 2 : index
    %c0_8 = arith.constant 0 : index
    %c0_9 = arith.constant 0 : index
    %29 = vector.load %arg2[%c2, %c0_8, %c0_9] : memref<5x128x128xbf16, #tpu.memory_space<vmem>>, vector<1x128x128xbf16>
    %30 = vector.shape_cast %29 : vector<1x128x128xbf16> to vector<128x128xbf16>
    %cst_10 = arith.constant dense<0.000000e+00> : vector<128x128xf32>
    %31 = tpu.matmul %28, %30, %cst_10 {dimension_numbers = #tpu.dot_dimension_numbers<[1], [0], [0], [1], [0, 0, 1, 1], [], []>} : vector<128x128xbf16>, vector<128x128xbf16>, vector<128x128xf32> -> vector<128x128xf32>
    %32 = arith.addf %22, %31 : vector<128x128xf32>
    %33 = vector.extract_strided_slice %0 {offsets = [0, 3], sizes = [128, 1], strides = [1, 1]} : vector<128x5xi32> to vector<128x1xi32>
    %34 = vector.broadcast %33 : vector<128x1xi32> to vector<128x128xi32>
    %35 = arith.cmpi eq, %1, %34 : vector<128x128xi32>
    %36 = arith.extui %35 : vector<128x128xi1> to vector<128x128xi32>
    %37 = arith.sitofp %36 : vector<128x128xi32> to vector<128x128xf32>
    %38 = arith.truncf %37 : vector<128x128xf32> to vector<128x128xbf16>
    %c3 = arith.constant 3 : index
    %c0_11 = arith.constant 0 : index
    %c0_12 = arith.constant 0 : index
    %39 = vector.load %arg2[%c3, %c0_11, %c0_12] : memref<5x128x128xbf16, #tpu.memory_space<vmem>>, vector<1x128x128xbf16>
    %40 = vector.shape_cast %39 : vector<1x128x128xbf16> to vector<128x128xbf16>
    %cst_13 = arith.constant dense<0.000000e+00> : vector<128x128xf32>
    %41 = tpu.matmul %38, %40, %cst_13 {dimension_numbers = #tpu.dot_dimension_numbers<[1], [0], [0], [1], [0, 0, 1, 1], [], []>} : vector<128x128xbf16>, vector<128x128xbf16>, vector<128x128xf32> -> vector<128x128xf32>
    %42 = arith.addf %32, %41 : vector<128x128xf32>
    %43 = vector.extract_strided_slice %0 {offsets = [0, 4], sizes = [128, 1], strides = [1, 1]} : vector<128x5xi32> to vector<128x1xi32>
    %44 = vector.broadcast %43 : vector<128x1xi32> to vector<128x128xi32>
    %45 = arith.cmpi eq, %1, %44 : vector<128x128xi32>
    %46 = arith.extui %45 : vector<128x128xi1> to vector<128x128xi32>
    %47 = arith.sitofp %46 : vector<128x128xi32> to vector<128x128xf32>
    %48 = arith.truncf %47 : vector<128x128xf32> to vector<128x128xbf16>
    %c4 = arith.constant 4 : index
    %c0_14 = arith.constant 0 : index
    %c0_15 = arith.constant 0 : index
    %49 = vector.load %arg2[%c4, %c0_14, %c0_15] : memref<5x128x128xbf16, #tpu.memory_space<vmem>>, vector<1x128x128xbf16>
    %50 = vector.shape_cast %49 : vector<1x128x128xbf16> to vector<128x128xbf16>
    %cst_16 = arith.constant dense<0.000000e+00> : vector<128x128xf32>
    %51 = tpu.matmul %48, %50, %cst_16 {dimension_numbers = #tpu.dot_dimension_numbers<[1], [0], [0], [1], [0, 0, 1, 1], [], []>} : vector<128x128xbf16>, vector<128x128xbf16>, vector<128x128xf32> -> vector<128x128xf32>
    %52 = arith.addf %42, %51 : vector<128x128xf32>
    %c0_17 = arith.constant 0 : index
    %c0_18 = arith.constant 0 : index
    %53 = vector.load %arg3[%c0_17, %c0_18] : memref<1x128xf32, #tpu.memory_space<vmem>>, vector<1x128xf32>
    %54 = vector.broadcast %53 : vector<1x128xf32> to vector<128x128xf32>
    %55 = arith.addf %52, %54 : vector<128x128xf32>
    %c0_19 = arith.constant 0 : index
    %c0_20 = arith.constant 0 : index
    %56 = vector.load %arg4[%c0_19, %c0_20] : memref<128x128xf32, #tpu.memory_space<vmem>>, vector<128x128xf32>
    tpu.vector_store %arg4[%c0_19, %c0_20], %55 {strides = array<i32>} : memref<128x128xf32, #tpu.memory_space<vmem>>, vector<128x128xf32>,
    return
  }
  func.func @transform_0(%arg0: i32) -> (i32, i32) {
    %c0_i32 = arith.constant 0 : i32
    %c0_i32_0 = arith.constant 0 : i32
    return %arg0, %c0_i32 : i32, i32
  }
  func.func @transform_1(%arg0: i32) -> (i32, i32, i32) {
    %c0_i32 = arith.constant 0 : i32
    %c0_i32_0 = arith.constant 0 : i32
    %c0_i32_1 = arith.constant 0 : i32
    %c0_i32_2 = arith.constant 0 : i32
    return %c0_i32, %c0_i32_0, %c0_i32_1 : i32, i32, i32
  }
  func.func @transform_2(%arg0: i32) -> (i32, i32) {
    %c0_i32 = arith.constant 0 : i32
    %c0_i32_0 = arith.constant 0 : i32
    %c0_i32_1 = arith.constant 0 : i32
    return %c0_i32, %c0_i32_0 : i32, i32
  }
  func.func @transform_3(%arg0: i32) -> (i32, i32) {
    %c0_i32 = arith.constant 0 : i32
    %c0_i32_0 = arith.constant 0 : i32
    return %arg0, %c0_i32 : i32, i32
  }
}

</mosaic_0001>

<llo_original>
// kernel: tpu_custom_call.1
$region0: #{tpu_custom_call.1}
  #allocation0 [shape = 'u32[]', space=smem, size = 0x4, offset = 0x4, fixed_abs, tag = 'smem constant byte address 0x4 - core index']
  #allocation1 [shape = 'u32[72,128]{1,0:T(1,128)}', space=vmem, size = 0x9000, scoped, tag = 'internal scratch']
  %s0 = inlined_call_operand.vmem [shape: s32[128,5], index: 0, kind: input, shape index: {}]
  %s1 = inlined_call_operand.hbm [shape: bf16[5,128,128], index: 1, kind: input, shape index: {}]
  %s2 = inlined_call_operand.vmem [shape: f32[1,128], index: 2, kind: input, shape index: {}]
  %s3 = inlined_call_operand.hbm [shape: f32[128,128], index: 3, kind: output, shape index: {}]
  %s4 = sld [smem:[#allocation0]]
  $region26: #{tpu_custom_call.1} parent=0
    _
  %s6 = ssub.s32 1, %s4
  %s7 = scalar_select 0, %s6, %s4
  $region1: #{tpu_custom_call.1} parent=0
    #allocation2 [shape = 'u8[163840]{0}', space=vmem, size = 0x28000, scoped, tag = 'input window, operand 1, single buffered']
    #allocation3 [shape = 's32[1]{0}', space=sflag, size = 0x4, scoped, tag = 'scoped memory for tpu_custom_call.1']
    #allocation4 [shape = 's32[1]{0}', space=sflag, size = 0x4, scoped, tag = 'scoped memory for tpu_custom_call.1']
    #allocation5 [shape = 'u8[65536]{0}', space=vmem, size = 0x10000, scoped, tag = 'output window, operand 0, single buffered']
    %8 = vsyncpa [#allocation3], 0
    %9 = vsyncpa [#allocation4], 0
    // Predicated region
    $region2: #{tpu_custom_call.1} parent=1 // pred_check
      _
    $region3: #{tpu_custom_call.1} parent=1 // pred_check_branch
      %11 = sbr.rel (0) target = $region5
    $region4: #{tpu_custom_call.1} parent=1 // pred_region
      _
    $region5: #{tpu_custom_call.1} parent=1 // pred_fallthru
      _
    // Predicated region
    $region6: #{tpu_custom_call.1} parent=1 // pred_check
      _
    $region7: #{tpu_custom_call.1} parent=1 // pred_check_branch
      %13 = sbr.rel (0) target = $region9
    $region8: #{tpu_custom_call.1} parent=1 // pred_region
      %15 = vsyncadd [#allocation3], 0
      %s16 = sshll.u32 %s1, 4
      %s17 = int_to_ptr.hbm [resolvable:$true] %s16
      %s18 = sshll.u32 [#allocation2], 4
      %s19 = int_to_ptr.vmem [resolvable:$true] %s18
      %24 = dma.hbm_to_vmem [thread:$0]  %s17, 5120, %s19, [#allocation3], 64, 64, 4
    $region9: #{tpu_custom_call.1} parent=1 // pred_fallthru
      _
    // Predicated region
    $region10: #{tpu_custom_call.1} parent=1 // pred_check
      _
    $region11: #{tpu_custom_call.1} parent=1 // pred_check_branch
      %26 = sbr.rel (0) target = $region13
    $region12: #{tpu_custom_call.1} parent=1 // pred_region
      _
    $region13: #{tpu_custom_call.1} parent=1 // pred_fallthru
      _
    // Predicated region
    $region14: #{tpu_custom_call.1} parent=1 // pred_check
      _
    $region15: #{tpu_custom_call.1} parent=1 // pred_check_branch
      %28 = sbr.rel (0) target = $region17
    $region16: #{tpu_custom_call.1} parent=1 // pred_region
      %30 = dma.done [#allocation3], 5120
    $region17: #{tpu_custom_call.1} parent=1 // pred_fallthru
      _
    %v31 = vld [vmem:[%s0] sm:$0xff]
    %v32 = vld [vmem:[%s0 + $0x8] sm:$0xff]
    %v33 = vld [vmem:[%s0 + $0x10] sm:$0xff]
    %v34 = vld [vmem:[%s0 + $0x18] sm:$0xff]
    %v35 = vld [vmem:[%s0 + $0x20] sm:$0xff]
    %v36 = vld [vmem:[%s0 + $0x28] sm:$0xff]
    %v37 = vld [vmem:[%s0 + $0x30] sm:$0xff]
    %v38 = vld [vmem:[%s0 + $0x38] sm:$0xff]
    %v39 = vld [vmem:[%s0 + $0x40] sm:$0xff]
    %v40 = vld [vmem:[%s0 + $0x48] sm:$0xff]
    %v41 = vld [vmem:[%s0 + $0x50] sm:$0xff]
    %v42 = vld [vmem:[%s0 + $0x58] sm:$0xff]
    %v43 = vld [vmem:[%s0 + $0x60] sm:$0xff]
    %v44 = vld [vmem:[%s0 + $0x68] sm:$0xff]
    %v45 = vld [vmem:[%s0 + $0x70] sm:$0xff]
    %v46 = vld [vmem:[%s0 + $0x78] sm:$0xff]
    %v47 = vlaneseq
    %v48 = vand.u32 %v47, 127
    %49 = vset.pattern.permute.xlu0 0
    %50 = vperm.xlu0 %49, %v31
    %v51 = vpop.permute.xlu0 %50
    %52 = vset.pattern.permute.xlu0 0
    %53 = vperm.xlu0 %52, %v32
    %v54 = vpop.permute.xlu0 %53
    %55 = vset.pattern.permute.xlu0 0
    %56 = vperm.xlu0 %55, %v33
    %v57 = vpop.permute.xlu0 %56
    %58 = vset.pattern.permute.xlu0 0
    %59 = vperm.xlu0 %58, %v34
    %v60 = vpop.permute.xlu0 %59
    %61 = vset.pattern.permute.xlu0 0
    %62 = vperm.xlu0 %61, %v35
    %v63 = vpop.permute.xlu0 %62
    %64 = vset.pattern.permute.xlu0 0
    %65 = vperm.xlu0 %64, %v36
    %v66 = vpop.permute.xlu0 %65
    %67 = vset.pattern.permute.xlu0 0
    %68 = vperm.xlu0 %67, %v37
    %v69 = vpop.permute.xlu0 %68
    %70 = vset.pattern.permute.xlu0 0
    %71 = vperm.xlu0 %70, %v38
    %v72 = vpop.permute.xlu0 %71
    %73 = vset.pattern.permute.xlu0 0
    %74 = vperm.xlu0 %73, %v39
    %v75 = vpop.permute.xlu0 %74
    %76 = vset.pattern.permute.xlu0 0
    %77 = vperm.xlu0 %76, %v40
    %v78 = vpop.permute.xlu0 %77
    %79 = vset.pattern.permute.xlu0 0
    %80 = vperm.xlu0 %79, %v41
    %v81 = vpop.permute.xlu0 %80
    %82 = vset.pattern.permute.xlu0 0
    %83 = vperm.xlu0 %82, %v42
    %v84 = vpop.permute.xlu0 %83
    %85 = vset.pattern.permute.xlu0 0
    %86 = vperm.xlu0 %85, %v43
    %v87 = vpop.permute.xlu0 %86
    %88 = vset.pattern.permute.xlu0 0
    %89 = vperm.xlu0 %88, %v44
    %v90 = vpop.permute.xlu0 %89
    %91 = vset.pattern.permute.xlu0 0
    %92 = vperm.xlu0 %91, %v45
    %v93 = vpop.permute.xlu0 %92
    %94 = vset.pattern.permute.xlu0 0
    %95 = vperm.xlu0 %94, %v46
    %v96 = vpop.permute.xlu0 %95
    %vm97 = vcmp.eq.s32.totalorder %v48, %v51
    %vm98 = vcmp.eq.s32.totalorder %v48, %v54
    %vm99 = vcmp.eq.s32.totalorder %v48, %v57
    %vm100 = vcmp.eq.s32.totalorder %v48, %v60
    %vm101 = vcmp.eq.s32.totalorder %v48, %v63
    %vm102 = vcmp.eq.s32.totalorder %v48, %v66
    %vm103 = vcmp.eq.s32.totalorder %v48, %v69
    %vm104 = vcmp.eq.s32.totalorder %v48, %v72
    %vm105 = vcmp.eq.s32.totalorder %v48, %v75
    %vm106 = vcmp.eq.s32.totalorder %v48, %v78
    %vm107 = vcmp.eq.s32.totalorder %v48, %v81
    %vm108 = vcmp.eq.s32.totalorder %v48, %v84
    %vm109 = vcmp.eq.s32.totalorder %v48, %v87
    %vm110 = vcmp.eq.s32.totalorder %v48, %v90
    %vm111 = vcmp.eq.s32.totalorder %v48, %v93
    %vm112 = vcmp.eq.s32.totalorder %v48, %v96
    %v113 = vsel %vm97, 1, 0
    %v114 = vsel %vm98, 1, 0
    %v115 = vsel %vm99, 1, 0
    %v116 = vsel %vm100, 1, 0
    %v117 = vsel %vm101, 1, 0
    %v118 = vsel %vm102, 1, 0
    %v119 = vsel %vm103, 1, 0
    %v120 = vsel %vm104, 1, 0
    %v121 = vsel %vm105, 1, 0
    %v122 = vsel %vm106, 1, 0
    %v123 = vsel %vm107, 1, 0
    %v124 = vsel %vm108, 1, 0
    %v125 = vsel %vm109, 1, 0
    %v126 = vsel %vm110, 1, 0
    %v127 = vsel %vm111, 1, 0
    %v128 = vsel %vm112, 1, 0
    %v129 = vcvt.s32.f32 %v113
    %v130 = vcvt.s32.f32 %v114
    %v131 = vcvt.s32.f32 %v115
    %v132 = vcvt.s32.f32 %v116
    %v133 = vcvt.s32.f32 %v117
    %v134 = vcvt.s32.f32 %v118
    %v135 = vcvt.s32.f32 %v119
    %v136 = vcvt.s32.f32 %v120
    %v137 = vcvt.s32.f32 %v121
    %v138 = vcvt.s32.f32 %v122
    %v139 = vcvt.s32.f32 %v123
    %v140 = vcvt.s32.f32 %v124
    %v141 = vcvt.s32.f32 %v125
    %v142 = vcvt.s32.f32 %v126
    %v143 = vcvt.s32.f32 %v127
    %v144 = vcvt.s32.f32 %v128
    %v145 = vpack.c.bf16 %v130, %v129
    %v146 = vpack.c.bf16 %v132, %v131
    %v147 = vpack.c.bf16 %v134, %v133
    %v148 = vpack.c.bf16 %v136, %v135
    %v149 = vpack.c.bf16 %v138, %v137
    %v150 = vpack.c.bf16 %v140, %v139
    %v151 = vpack.c.bf16 %v142, %v141
    %v152 = vpack.c.bf16 %v144, %v143
    %v153 = vld [vmem:[#allocation2] sm:$0xf]
    %v154 = vld [vmem:[#allocation2 + $0x4] sm:$0xf]
    %v155 = vld [vmem:[#allocation2 + $0x8] sm:$0xf]
    %v156 = vld [vmem:[#allocation2 + $0xc] sm:$0xf]
    %v157 = vld [vmem:[#allocation2 + $0x10] sm:$0xf]
    %v158 = vld [vmem:[#allocation2 + $0x14] sm:$0xf]
    %v159 = vld [vmem:[#allocation2 + $0x18] sm:$0xf]
    %v160 = vld [vmem:[#allocation2 + $0x1c] sm:$0xf]
    %v161 = vld [vmem:[#allocation2 + $0x20] sm:$0xf]
    %v162 = vld [vmem:[#allocation2 + $0x24] sm:$0xf]
    %v163 = vld [vmem:[#allocation2 + $0x28] sm:$0xf]
    %v164 = vld [vmem:[#allocation2 + $0x2c] sm:$0xf]
    %v165 = vld [vmem:[#allocation2 + $0x30] sm:$0xf]
    %v166 = vld [vmem:[#allocation2 + $0x34] sm:$0xf]
    %v167 = vld [vmem:[#allocation2 + $0x38] sm:$0xf]
    %v168 = vld [vmem:[#allocation2 + $0x3c] sm:$0xf]
    %169 = vset.pattern.permute.xlu0 1
    %170 = vperm.xlu0 %169, %v31
    %v171 = vpop.permute.xlu0 %170
    %172 = vset.pattern.permute.xlu0 1
    %173 = vperm.xlu0 %172, %v32
    %v174 = vpop.permute.xlu0 %173
    %175 = vset.pattern.permute.xlu0 1
    %176 = vperm.xlu0 %175, %v33
    %v177 = vpop.permute.xlu0 %176
    %178 = vset.pattern.permute.xlu0 1
    %179 = vperm.xlu0 %178, %v34
    %v180 = vpop.permute.xlu0 %179
    %181 = vset.pattern.permute.xlu0 1
    %182 = vperm.xlu0 %181, %v35
    %v183 = vpop.permute.xlu0 %182
    %184 = vset.pattern.permute.xlu0 1
    %185 = vperm.xlu0 %184, %v36
    %v186 = vpop.permute.xlu0 %185
    %187 = vset.pattern.permute.xlu0 1
    %188 = vperm.xlu0 %187, %v37
    %v189 = vpop.permute.xlu0 %188
    %190 = vset.pattern.permute.xlu0 1
    %191 = vperm.xlu0 %190, %v38
    %v192 = vpop.permute.xlu0 %191
    %193 = vset.pattern.permute.xlu0 1
    %194 = vperm.xlu0 %193, %v39
    %v195 = vpop.permute.xlu0 %194
    %196 = vset.pattern.permute.xlu0 1
    %197 = vperm.xlu0 %196, %v40
    %v198 = vpop.permute.xlu0 %197
    %199 = vset.pattern.permute.xlu0 1
    %200 = vperm.xlu0 %199, %v41
    %v201 = vpop.permute.xlu0 %200
    %202 = vset.pattern.permute.xlu0 1
    %203 = vperm.xlu0 %202, %v42
    %v204 = vpop.permute.xlu0 %203
    %205 = vset.pattern.permute.xlu0 1
    %206 = vperm.xlu0 %205, %v43
    %v207 = vpop.permute.xlu0 %206
    %208 = vset.pattern.permute.xlu0 1
    %209 = vperm.xlu0 %208, %v44
    %v210 = vpop.permute.xlu0 %209
    %211 = vset.pattern.permute.xlu0 1
    %212 = vperm.xlu0 %211, %v45
    %v213 = vpop.permute.xlu0 %212
    %214 = vset.pattern.permute.xlu0 1
    %215 = vperm.xlu0 %214, %v46
    %v216 = vpop.permute.xlu0 %215
    %vm217 = vcmp.eq.s32.totalorder %v48, %v171
    %vm218 = vcmp.eq.s32.totalorder %v48, %v174
    %vm219 = vcmp.eq.s32.totalorder %v48, %v177
    %vm220 = vcmp.eq.s32.totalorder %v48, %v180
    %vm221 = vcmp.eq.s32.totalorder %v48, %v183
    %vm222 = vcmp.eq.s32.totalorder %v48, %v186
    %vm223 = vcmp.eq.s32.totalorder %v48, %v189
    %vm224 = vcmp.eq.s32.totalorder %v48, %v192
    %vm225 = vcmp.eq.s32.totalorder %v48, %v195
    %vm226 = vcmp.eq.s32.totalorder %v48, %v198
    %vm227 = vcmp.eq.s32.totalorder %v48, %v201
    %vm228 = vcmp.eq.s32.totalorder %v48, %v204
    %vm229 = vcmp.eq.s32.totalorder %v48, %v207
    %vm230 = vcmp.eq.s32.totalorder %v48, %v210
    %vm231 = vcmp.eq.s32.totalorder %v48, %v213
    %vm232 = vcmp.eq.s32.totalorder %v48, %v216
    %v233 = vsel %vm217, 1, 0
    %v234 = vsel %vm218, 1, 0
    %v235 = vsel %vm219, 1, 0
    %v236 = vsel %vm220, 1, 0
    %v237 = vsel %vm221, 1, 0
    %v238 = vsel %vm222, 1, 0
    %v239 = vsel %vm223, 1, 0
    %v240 = vsel %vm224, 1, 0
    %v241 = vsel %vm225, 1, 0
    %v242 = vsel %vm226, 1, 0
    %v243 = vsel %vm227, 1, 0
    %v244 = vsel %vm228, 1, 0
    %v245 = vsel %vm229, 1, 0
    %v246 = vsel %vm230, 1, 0
    %v247 = vsel %vm231, 1, 0
    %v248 = vsel %vm232, 1, 0
    %v249 = vcvt.s32.f32 %v233
    %v250 = vcvt.s32.f32 %v234
    %v251 = vcvt.s32.f32 %v235
    %v252 = vcvt.s32.f32 %v236
    %v253 = vcvt.s32.f32 %v237
    %v254 = vcvt.s32.f32 %v238
    %v255 = vcvt.s32.f32 %v239
    %v256 = vcvt.s32.f32 %v240
    %v257 = vcvt.s32.f32 %v241
    %v258 = vcvt.s32.f32 %v242
    %v259 = vcvt.s32.f32 %v243
    %v260 = vcvt.s32.f32 %v244
    %v261 = vcvt.s32.f32 %v245
    %v262 = vcvt.s32.f32 %v246
    %v263 = vcvt.s32.f32 %v247
    %v264 = vcvt.s32.f32 %v248
    %v265 = vpack.c.bf16 %v250, %v249
    %v266 = vpack.c.bf16 %v252, %v251
    %v267 = vpack.c.bf16 %v254, %v253
    %v268 = vpack.c.bf16 %v256, %v255
    %v269 = vpack.c.bf16 %v258, %v257
    %v270 = vpack.c.bf16 %v260, %v259
    %v271 = vpack.c.bf16 %v262, %v261
    %v272 = vpack.c.bf16 %v264, %v263
    %s273 = scalar_lea.vmem [#allocation2], 64
    %v274 = vld [vmem:[%s273] sm:$0xf]
    %v275 = vld [vmem:[%s273 + $0x4] sm:$0xf]
    %v276 = vld [vmem:[%s273 + $0x8] sm:$0xf]
    %v277 = vld [vmem:[%s273 + $0xc] sm:$0xf]
    %v278 = vld [vmem:[%s273 + $0x10] sm:$0xf]
    %v279 = vld [vmem:[%s273 + $0x14] sm:$0xf]
    %v280 = vld [vmem:[%s273 + $0x18] sm:$0xf]
    %v281 = vld [vmem:[%s273 + $0x1c] sm:$0xf]
    %v282 = vld [vmem:[%s273 + $0x20] sm:$0xf]
    %v283 = vld [vmem:[%s273 + $0x24] sm:$0xf]
    %v284 = vld [vmem:[%s273 + $0x28] sm:$0xf]
    %v285 = vld [vmem:[%s273 + $0x2c] sm:$0xf]
    %v286 = vld [vmem:[%s273 + $0x30] sm:$0xf]
    %v287 = vld [vmem:[%s273 + $0x34] sm:$0xf]
    %v288 = vld [vmem:[%s273 + $0x38] sm:$0xf]
    %v289 = vld [vmem:[%s273 + $0x3c] sm:$0xf]
    %v306 = vunpack.c.l.b16 %v274
    %v307 = vunpack.c.l.b16 %v275
    %v308 = vunpack.c.l.b16 %v276
    %v309 = vunpack.c.l.b16 %v277
    %v310 = vunpack.c.l.b16 %v278
    %v311 = vunpack.c.l.b16 %v279
    %v312 = vunpack.c.l.b16 %v280
    %v313 = vunpack.c.l.b16 %v281
    %v314 = vunpack.c.l.b16 %v282
    %v315 = vunpack.c.l.b16 %v283
    %v316 = vunpack.c.l.b16 %v284
    %v317 = vunpack.c.l.b16 %v285
    %v318 = vunpack.c.l.b16 %v286
    %v319 = vunpack.c.l.b16 %v287
    %v320 = vunpack.c.l.b16 %v288
    %v321 = vunpack.c.l.b16 %v289
    %v322 = vpack.c.b16 %v307, %v306
    %v323 = vpack.c.b16 %v309, %v308
    %v324 = vpack.c.b16 %v311, %v310
    %v325 = vpack.c.b16 %v313, %v312
    %v326 = vpack.c.b16 %v315, %v314
    %v327 = vpack.c.b16 %v317, %v316
    %v328 = vpack.c.b16 %v319, %v318
    %v329 = vpack.c.b16 %v321, %v320
    %338 = vmatpush.bf16.msra.mxu0 %v329
    %339 = vmatpush.bf16.msra.mxu0 %v328
    %340 = vmatpush.bf16.msra.mxu0 %v327
    %341 = vmatpush.bf16.msra.mxu0 %v326
    %342 = vmatpush.bf16.msra.mxu0 %v325
    %343 = vmatpush.bf16.msra.mxu0 %v324
    %344 = vmatpush.bf16.msra.mxu0 %v323
    %345 = vmatpush.bf16.msra.mxu0 %v322
    %346 = vmatmul.bf16.gmra.mxu0 %v265
    %v347 = vpop.f32.mrf.mxu0
    %v348 = vadd.f32 0.0, %v347
    %v349 = vpop.f32.mrf.mxu0
    %v350 = vadd.f32 0.0, %v349
    %351 = vmatmul.bf16.gmra.mxu0 %v266
    %v352 = vpop.f32.mrf.mxu0
    %v353 = vadd.f32 0.0, %v352
    %v354 = vpop.f32.mrf.mxu0
    %v355 = vadd.f32 0.0, %v354
    %356 = vmatmul.bf16.gmra.mxu0 %v267
    %v357 = vpop.f32.mrf.mxu0
    %v358 = vadd.f32 0.0, %v357
    %v359 = vpop.f32.mrf.mxu0
    %v360 = vadd.f32 0.0, %v359
    %361 = vmatmul.bf16.gmra.mxu0 %v268
    %v362 = vpop.f32.mrf.mxu0
    %v363 = vadd.f32 0.0, %v362
    %v364 = vpop.f32.mrf.mxu0
    %v365 = vadd.f32 0.0, %v364
    %366 = vmatmul.bf16.gmra.mxu0 %v269
    %v367 = vpop.f32.mrf.mxu0
    %v368 = vadd.f32 0.0, %v367
    %v369 = vpop.f32.mrf.mxu0
    %v370 = vadd.f32 0.0, %v369
    %371 = vmatmul.bf16.gmra.mxu0 %v270
    %v372 = vpop.f32.mrf.mxu0
    %v373 = vadd.f32 0.0, %v372
    %v374 = vpop.f32.mrf.mxu0
    %v375 = vadd.f32 0.0, %v374
    %376 = vmatmul.bf16.gmra.mxu0 %v271
    %v377 = vpop.f32.mrf.mxu0
    %v378 = vadd.f32 0.0, %v377
    %v379 = vpop.f32.mrf.mxu0
    %v380 = vadd.f32 0.0, %v379
    %381 = vmatmul.bf16.gmra.mxu0 %v272
    %v382 = vpop.f32.mrf.mxu0
    %v383 = vadd.f32 0.0, %v382
    %v384 = vpop.f32.mrf.mxu0
    %v385 = vadd.f32 0.0, %v384
    %386 = vdwg.mxu0
    %v403 = vunpack.c.l.b16 %v153
    %v404 = vunpack.c.l.b16 %v154
    %v405 = vunpack.c.l.b16 %v155
    %v406 = vunpack.c.l.b16 %v156
    %v407 = vunpack.c.l.b16 %v157
    %v408 = vunpack.c.l.b16 %v158
    %v409 = vunpack.c.l.b16 %v159
    %v410 = vunpack.c.l.b16 %v160
    %v411 = vunpack.c.l.b16 %v161
    %v412 = vunpack.c.l.b16 %v162
    %v413 = vunpack.c.l.b16 %v163
    %v414 = vunpack.c.l.b16 %v164
    %v415 = vunpack.c.l.b16 %v165
    %v416 = vunpack.c.l.b16 %v166
    %v417 = vunpack.c.l.b16 %v167
    %v418 = vunpack.c.l.b16 %v168
    %v419 = vpack.c.b16 %v404, %v403
    %v420 = vpack.c.b16 %v406, %v405
    %v421 = vpack.c.b16 %v408, %v407
    %v422 = vpack.c.b16 %v410, %v409
    %v423 = vpack.c.b16 %v412, %v411
    %v424 = vpack.c.b16 %v414, %v413
    %v425 = vpack.c.b16 %v416, %v415
    %v426 = vpack.c.b16 %v418, %v417
    %435 = vmatpush.bf16.msra.mxu0 %v426
    %436 = vmatpush.bf16.msra.mxu0 %v425
    %437 = vmatpush.bf16.msra.mxu0 %v424
    %438 = vmatpush.bf16.msra.mxu0 %v423
    %439 = vmatpush.bf16.msra.mxu0 %v422
    %440 = vmatpush.bf16.msra.mxu0 %v421
    %441 = vmatpush.bf16.msra.mxu0 %v420
    %442 = vmatpush.bf16.msra.mxu0 %v419
    %443 = vmatmul.bf16.gmra.mxu0 %v145
    %v444 = vpop.f32.mrf.mxu0
    %v445 = vadd.f32 %v348, %v444
    %v446 = vpop.f32.mrf.mxu0
    %v447 = vadd.f32 %v350, %v446
    %448 = vmatmul.bf16.gmra.mxu0 %v146
    %v449 = vpop.f32.mrf.mxu0
    %v450 = vadd.f32 %v353, %v449
    %v451 = vpop.f32.mrf.mxu0
    %v452 = vadd.f32 %v355, %v451
    %453 = vmatmul.bf16.gmra.mxu0 %v147
    %v454 = vpop.f32.mrf.mxu0
    %v455 = vadd.f32 %v358, %v454
    %v456 = vpop.f32.mrf.mxu0
    %v457 = vadd.f32 %v360, %v456
    %458 = vmatmul.bf16.gmra.mxu0 %v148
    %v459 = vpop.f32.mrf.mxu0
    %v460 = vadd.f32 %v363, %v459
    %v461 = vpop.f32.mrf.mxu0
    %v462 = vadd.f32 %v365, %v461
    %463 = vmatmul.bf16.gmra.mxu0 %v149
    %v464 = vpop.f32.mrf.mxu0
    %v465 = vadd.f32 %v368, %v464
    %v466 = vpop.f32.mrf.mxu0
    %v467 = vadd.f32 %v370, %v466
    %468 = vmatmul.bf16.gmra.mxu0 %v150
    %v469 = vpop.f32.mrf.mxu0
    %v470 = vadd.f32 %v373, %v469
    %v471 = vpop.f32.mrf.mxu0
    %v472 = vadd.f32 %v375, %v471
    %473 = vmatmul.bf16.gmra.mxu0 %v151
    %v474 = vpop.f32.mrf.mxu0
    %v475 = vadd.f32 %v378, %v474
    %v476 = vpop.f32.mrf.mxu0
    %v477 = vadd.f32 %v380, %v476
    %478 = vmatmul.bf16.gmra.mxu0 %v152
    %v479 = vpop.f32.mrf.mxu0
    %v480 = vadd.f32 %v383, %v479
    %v481 = vpop.f32.mrf.mxu0
    %v482 = vadd.f32 %v385, %v481
    %483 = vdwg.mxu0
    %484 = vset.pattern.permute.xlu0 2
    %485 = vperm.xlu0 %484, %v31
    %v486 = vpop.permute.xlu0 %485
    %487 = vset.pattern.permute.xlu0 2
    %488 = vperm.xlu0 %487, %v32
    %v489 = vpop.permute.xlu0 %488
    %490 = vset.pattern.permute.xlu0 2
    %491 = vperm.xlu0 %490, %v33
    %v492 = vpop.permute.xlu0 %491
    %493 = vset.pattern.permute.xlu0 2
    %494 = vperm.xlu0 %493, %v34
    %v495 = vpop.permute.xlu0 %494
    %496 = vset.pattern.permute.xlu0 2
    %497 = vperm.xlu0 %496, %v35
    %v498 = vpop.permute.xlu0 %497
    %499 = vset.pattern.permute.xlu0 2
    %500 = vperm.xlu0 %499, %v36
    %v501 = vpop.permute.xlu0 %500
    %502 = vset.pattern.permute.xlu0 2
    %503 = vperm.xlu0 %502, %v37
    %v504 = vpop.permute.xlu0 %503
    %505 = vset.pattern.permute.xlu0 2
    %506 = vperm.xlu0 %505, %v38
    %v507 = vpop.permute.xlu0 %506
    %508 = vset.pattern.permute.xlu0 2
    %509 = vperm.xlu0 %508, %v39
    %v510 = vpop.permute.xlu0 %509
    %511 = vset.pattern.permute.xlu0 2
    %512 = vperm.xlu0 %511, %v40
    %v513 = vpop.permute.xlu0 %512
    %514 = vset.pattern.permute.xlu0 2
    %515 = vperm.xlu0 %514, %v41
    %v516 = vpop.permute.xlu0 %515
    %517 = vset.pattern.permute.xlu0 2
    %518 = vperm.xlu0 %517, %v42
    %v519 = vpop.permute.xlu0 %518
    %520 = vset.pattern.permute.xlu0 2
    %521 = vperm.xlu0 %520, %v43
    %v522 = vpop.permute.xlu0 %521
    %523 = vset.pattern.permute.xlu0 2
    %524 = vperm.xlu0 %523, %v44
    %v525 = vpop.permute.xlu0 %524
    %526 = vset.pattern.permute.xlu0 2
    %527 = vperm.xlu0 %526, %v45
    %v528 = vpop.permute.xlu0 %527
    %529 = vset.pattern.permute.xlu0 2
    %530 = vperm.xlu0 %529, %v46
    %v531 = vpop.permute.xlu0 %530
    %vm532 = vcmp.eq.s32.totalorder %v48, %v486
    %vm533 = vcmp.eq.s32.totalorder %v48, %v489
    %vm534 = vcmp.eq.s32.totalorder %v48, %v492
    %vm535 = vcmp.eq.s32.totalorder %v48, %v495
    %vm536 = vcmp.eq.s32.totalorder %v48, %v498
    %vm537 = vcmp.eq.s32.totalorder %v48, %v501
    %vm538 = vcmp.eq.s32.totalorder %v48, %v504
    %vm539 = vcmp.eq.s32.totalorder %v48, %v507
    %vm540 = vcmp.eq.s32.totalorder %v48, %v510
    %vm541 = vcmp.eq.s32.totalorder %v48, %v513
    %vm542 = vcmp.eq.s32.totalorder %v48, %v516
    %vm543 = vcmp.eq.s32.totalorder %v48, %v519
    %vm544 = vcmp.eq.s32.totalorder %v48, %v522
    %vm545 = vcmp.eq.s32.totalorder %v48, %v525
    %vm546 = vcmp.eq.s32.totalorder %v48, %v528
    %vm547 = vcmp.eq.s32.totalorder %v48, %v531
    %v548 = vsel %vm532, 1, 0
    %v549 = vsel %vm533, 1, 0
    %v550 = vsel %vm534, 1, 0
    %v551 = vsel %vm535, 1, 0
    %v552 = vsel %vm536, 1, 0
    %v553 = vsel %vm537, 1, 0
    %v554 = vsel %vm538, 1, 0
    %v555 = vsel %vm539, 1, 0
    %v556 = vsel %vm540, 1, 0
    %v557 = vsel %vm541, 1, 0
    %v558 = vsel %vm542, 1, 0
    %v559 = vsel %vm543, 1, 0
    %v560 = vsel %vm544, 1, 0
    %v561 = vsel %vm545, 1, 0
    %v562 = vsel %vm546, 1, 0
    %v563 = vsel %vm547, 1, 0
    %v564 = vcvt.s32.f32 %v548
    %v565 = vcvt.s32.f32 %v549
    %v566 = vcvt.s32.f32 %v550
    %v567 = vcvt.s32.f32 %v551
    %v568 = vcvt.s32.f32 %v552
    %v569 = vcvt.s32.f32 %v553
    %v570 = vcvt.s32.f32 %v554
    %v571 = vcvt.s32.f32 %v555
    %v572 = vcvt.s32.f32 %v556
    %v573 = vcvt.s32.f32 %v557
    %v574 = vcvt.s32.f32 %v558
    %v575 = vcvt.s32.f32 %v559
    %v576 = vcvt.s32.f32 %v560
    %v577 = vcvt.s32.f32 %v561
    %v578 = vcvt.s32.f32 %v562
    %v579 = vcvt.s32.f32 %v563
    %v580 = vpack.c.bf16 %v565, %v564
    %v581 = vpack.c.bf16 %v567, %v566
    %v582 = vpack.c.bf16 %v569, %v568
    %v583 = vpack.c.bf16 %v571, %v570
    %v584 = vpack.c.bf16 %v573, %v572
    %v585 = vpack.c.bf16 %v575, %v574
    %v586 = vpack.c.bf16 %v577, %v576
    %v587 = vpack.c.bf16 %v579, %v578
    %s588 = scalar_lea.vmem [#allocation2], 128
    %v589 = vld [vmem:[%s588] sm:$0xf]
    %v590 = vld [vmem:[%s588 + $0x4] sm:$0xf]
    %v591 = vld [vmem:[%s588 + $0x8] sm:$0xf]
    %v592 = vld [vmem:[%s588 + $0xc] sm:$0xf]
    %v593 = vld [vmem:[%s588 + $0x10] sm:$0xf]
    %v594 = vld [vmem:[%s588 + $0x14] sm:$0xf]
    %v595 = vld [vmem:[%s588 + $0x18] sm:$0xf]
    %v596 = vld [vmem:[%s588 + $0x1c] sm:$0xf]
    %v597 = vld [vmem:[%s588 + $0x20] sm:$0xf]
    %v598 = vld [vmem:[%s588 + $0x24] sm:$0xf]
    %v599 = vld [vmem:[%s588 + $0x28] sm:$0xf]
    %v600 = vld [vmem:[%s588 + $0x2c] sm:$0xf]
    %v601 = vld [vmem:[%s588 + $0x30] sm:$0xf]
    %v602 = vld [vmem:[%s588 + $0x34] sm:$0xf]
    %v603 = vld [vmem:[%s588 + $0x38] sm:$0xf]
    %v604 = vld [vmem:[%s588 + $0x3c] sm:$0xf]
    %v621 = vunpack.c.l.b16 %v589
    %v622 = vunpack.c.l.b16 %v590
    %v623 = vunpack.c.l.b16 %v591
    %v624 = vunpack.c.l.b16 %v592
    %v625 = vunpack.c.l.b16 %v593
    %v626 = vunpack.c.l.b16 %v594
    %v627 = vunpack.c.l.b16 %v595
    %v628 = vunpack.c.l.b16 %v596
    %v629 = vunpack.c.l.b16 %v597
    %v630 = vunpack.c.l.b16 %v598
    %v631 = vunpack.c.l.b16 %v599
    %v632 = vunpack.c.l.b16 %v600
    %v633 = vunpack.c.l.b16 %v601
    %v634 = vunpack.c.l.b16 %v602
    %v635 = vunpack.c.l.b16 %v603
    %v636 = vunpack.c.l.b16 %v604
    %v637 = vpack.c.b16 %v622, %v621
    %v638 = vpack.c.b16 %v624, %v623
    %v639 = vpack.c.b16 %v626, %v625
    %v640 = vpack.c.b16 %v628, %v627
    %v641 = vpack.c.b16 %v630, %v629
    %v642 = vpack.c.b16 %v632, %v631
    %v643 = vpack.c.b16 %v634, %v633
    %v644 = vpack.c.b16 %v636, %v635
    %653 = vmatpush.bf16.msra.mxu0 %v644
    %654 = vmatpush.bf16.msra.mxu0 %v643
    %655 = vmatpush.bf16.msra.mxu0 %v642
    %656 = vmatpush.bf16.msra.mxu0 %v641
    %657 = vmatpush.bf16.msra.mxu0 %v640
    %658 = vmatpush.bf16.msra.mxu0 %v639
    %659 = vmatpush.bf16.msra.mxu0 %v638
    %660 = vmatpush.bf16.msra.mxu0 %v637
    %661 = vmatmul.bf16.gmra.mxu0 %v580
    %v662 = vpop.f32.mrf.mxu0
    %v663 = vadd.f32 0.0, %v662
    %v664 = vpop.f32.mrf.mxu0
    %v665 = vadd.f32 0.0, %v664
    %666 = vmatmul.bf16.gmra.mxu0 %v581
    %v667 = vpop.f32.mrf.mxu0
    %v668 = vadd.f32 0.0, %v667
    %v669 = vpop.f32.mrf.mxu0
    %v670 = vadd.f32 0.0, %v669
    %671 = vmatmul.bf16.gmra.mxu0 %v582
    %v672 = vpop.f32.mrf.mxu0
    %v673 = vadd.f32 0.0, %v672
    %v674 = vpop.f32.mrf.mxu0
    %v675 = vadd.f32 0.0, %v674
    %676 = vmatmul.bf16.gmra.mxu0 %v583
    %v677 = vpop.f32.mrf.mxu0
    %v678 = vadd.f32 0.0, %v677
    %v679 = vpop.f32.mrf.mxu0
    %v680 = vadd.f32 0.0, %v679
    %681 = vmatmul.bf16.gmra.mxu0 %v584
    %v682 = vpop.f32.mrf.mxu0
    %v683 = vadd.f32 0.0, %v682
    %v684 = vpop.f32.mrf.mxu0
    %v685 = vadd.f32 0.0, %v684
    %686 = vmatmul.bf16.gmra.mxu0 %v585
    %v687 = vpop.f32.mrf.mxu0
    %v688 = vadd.f32 0.0, %v687
    %v689 = vpop.f32.mrf.mxu0
    %v690 = vadd.f32 0.0, %v689
    %691 = vmatmul.bf16.gmra.mxu0 %v586
    %v692 = vpop.f32.mrf.mxu0
    %v693 = vadd.f32 0.0, %v692
    %v694 = vpop.f32.mrf.mxu0
    %v695 = vadd.f32 0.0, %v694
    %696 = vmatmul.bf16.gmra.mxu0 %v587
    %v697 = vpop.f32.mrf.mxu0
    %v698 = vadd.f32 0.0, %v697
    %v699 = vpop.f32.mrf.mxu0
    %v700 = vadd.f32 0.0, %v699
    %701 = vdwg.mxu0
    %v702 = vadd.f32 %v445, %v663
    %v703 = vadd.f32 %v447, %v665
    %v704 = vadd.f32 %v450, %v668
    %v705 = vadd.f32 %v452, %v670
    %v706 = vadd.f32 %v455, %v673
    %v707 = vadd.f32 %v457, %v675
    %v708 = vadd.f32 %v460, %v678
    %v709 = vadd.f32 %v462, %v680
    %v710 = vadd.f32 %v465, %v683
    %v711 = vadd.f32 %v467, %v685
    %v712 = vadd.f32 %v470, %v688
    %v713 = vadd.f32 %v472, %v690
    %v714 = vadd.f32 %v475, %v693
    %v715 = vadd.f32 %v477, %v695
    %v716 = vadd.f32 %v480, %v698
    %v717 = vadd.f32 %v482, %v700
    %718 = vset.pattern.permute.xlu0 3
    %719 = vperm.xlu0 %718, %v31
    %v720 = vpop.permute.xlu0 %719
    %721 = vset.pattern.permute.xlu0 3
    %722 = vperm.xlu0 %721, %v32
    %v723 = vpop.permute.xlu0 %722
    %724 = vset.pattern.permute.xlu0 3
    %725 = vperm.xlu0 %724, %v33
    %v726 = vpop.permute.xlu0 %725
    %727 = vset.pattern.permute.xlu0 3
    %728 = vperm.xlu0 %727, %v34
    %v729 = vpop.permute.xlu0 %728
    %730 = vset.pattern.permute.xlu0 3
    %731 = vperm.xlu0 %730, %v35
    %v732 = vpop.permute.xlu0 %731
    %733 = vset.pattern.permute.xlu0 3
    %734 = vperm.xlu0 %733, %v36
    %v735 = vpop.permute.xlu0 %734
    %736 = vset.pattern.permute.xlu0 3
    %737 = vperm.xlu0 %736, %v37
    %v738 = vpop.permute.xlu0 %737
    %739 = vset.pattern.permute.xlu0 3
    %740 = vperm.xlu0 %739, %v38
    %v741 = vpop.permute.xlu0 %740
    %742 = vset.pattern.permute.xlu0 3
    %743 = vperm.xlu0 %742, %v39
    %v744 = vpop.permute.xlu0 %743
    %745 = vset.pattern.permute.xlu0 3
    %746 = vperm.xlu0 %745, %v40
    %v747 = vpop.permute.xlu0 %746
    %748 = vset.pattern.permute.xlu0 3
    %749 = vperm.xlu0 %748, %v41
    %v750 = vpop.permute.xlu0 %749
    %751 = vset.pattern.permute.xlu0 3
    %752 = vperm.xlu0 %751, %v42
    %v753 = vpop.permute.xlu0 %752
    %754 = vset.pattern.permute.xlu0 3
    %755 = vperm.xlu0 %754, %v43
    %v756 = vpop.permute.xlu0 %755
    %757 = vset.pattern.permute.xlu0 3
    %758 = vperm.xlu0 %757, %v44
    %v759 = vpop.permute.xlu0 %758
    %760 = vset.pattern.permute.xlu0 3
    %761 = vperm.xlu0 %760, %v45
    %v762 = vpop.permute.xlu0 %761
    %763 = vset.pattern.permute.xlu0 3
    %764 = vperm.xlu0 %763, %v46
    %v765 = vpop.permute.xlu0 %764
    %vm766 = vcmp.eq.s32.totalorder %v48, %v720
    %vm767 = vcmp.eq.s32.totalorder %v48, %v723
    %vm768 = vcmp.eq.s32.totalorder %v48, %v726
    %vm769 = vcmp.eq.s32.totalorder %v48, %v729
    %vm770 = vcmp.eq.s32.totalorder %v48, %v732
    %vm771 = vcmp.eq.s32.totalorder %v48, %v735
    %vm772 = vcmp.eq.s32.totalorder %v48, %v738
    %vm773 = vcmp.eq.s32.totalorder %v48, %v741
    %vm774 = vcmp.eq.s32.totalorder %v48, %v744
    %vm775 = vcmp.eq.s32.totalorder %v48, %v747
    %vm776 = vcmp.eq.s32.totalorder %v48, %v750
    %vm777 = vcmp.eq.s32.totalorder %v48, %v753
    %vm778 = vcmp.eq.s32.totalorder %v48, %v756
    %vm779 = vcmp.eq.s32.totalorder %v48, %v759
    %vm780 = vcmp.eq.s32.totalorder %v48, %v762
    %vm781 = vcmp.eq.s32.totalorder %v48, %v765
    %v782 = vsel %vm766, 1, 0
    %v783 = vsel %vm767, 1, 0
    %v784 = vsel %vm768, 1, 0
    %v785 = vsel %vm769, 1, 0
    %v786 = vsel %vm770, 1, 0
    %v787 = vsel %vm771, 1, 0
    %v788 = vsel %vm772, 1, 0
    %v789 = vsel %vm773, 1, 0
    %v790 = vsel %vm774, 1, 0
    %v791 = vsel %vm775, 1, 0
    %v792 = vsel %vm776, 1, 0
    %v793 = vsel %vm777, 1, 0
    %v794 = vsel %vm778, 1, 0
    %v795 = vsel %vm779, 1, 0
    %v796 = vsel %vm780, 1, 0
    %v797 = vsel %vm781, 1, 0
    %v798 = vcvt.s32.f32 %v782
    %v799 = vcvt.s32.f32 %v783
    %v800 = vcvt.s32.f32 %v784
    %v801 = vcvt.s32.f32 %v785
    %v802 = vcvt.s32.f32 %v786
    %v803 = vcvt.s32.f32 %v787
    %v804 = vcvt.s32.f32 %v788
    %v805 = vcvt.s32.f32 %v789
    %v806 = vcvt.s32.f32 %v790
    %v807 = vcvt.s32.f32 %v791
    %v808 = vcvt.s32.f32 %v792
    %v809 = vcvt.s32.f32 %v793
    %v810 = vcvt.s32.f32 %v794
    %v811 = vcvt.s32.f32 %v795
    %v812 = vcvt.s32.f32 %v796
    %v813 = vcvt.s32.f32 %v797
    %v814 = vpack.c.bf16 %v799, %v798
    %v815 = vpack.c.bf16 %v801, %v800
    %v816 = vpack.c.bf16 %v803, %v802
    %v817 = vpack.c.bf16 %v805, %v804
    %v818 = vpack.c.bf16 %v807, %v806
    %v819 = vpack.c.bf16 %v809, %v808
    %v820 = vpack.c.bf16 %v811, %v810
    %v821 = vpack.c.bf16 %v813, %v812
    %s822 = scalar_lea.vmem [#allocation2], 192
    %v823 = vld [vmem:[%s822] sm:$0xf]
    %v824 = vld [vmem:[%s822 + $0x4] sm:$0xf]
    %v825 = vld [vmem:[%s822 + $0x8] sm:$0xf]
    %v826 = vld [vmem:[%s822 + $0xc] sm:$0xf]
    %v827 = vld [vmem:[%s822 + $0x10] sm:$0xf]
    %v828 = vld [vmem:[%s822 + $0x14] sm:$0xf]
    %v829 = vld [vmem:[%s822 + $0x18] sm:$0xf]
    %v830 = vld [vmem:[%s822 + $0x1c] sm:$0xf]
    %v831 = vld [vmem:[%s822 + $0x20] sm:$0xf]
    %v832 = vld [vmem:[%s822 + $0x24] sm:$0xf]
    %v833 = vld [vmem:[%s822 + $0x28] sm:$0xf]
    %v834 = vld [vmem:[%s822 + $0x2c] sm:$0xf]
    %v835 = vld [vmem:[%s822 + $0x30] sm:$0xf]
    %v836 = vld [vmem:[%s822 + $0x34] sm:$0xf]
    %v837 = vld [vmem:[%s822 + $0x38] sm:$0xf]
    %v838 = vld [vmem:[%s822 + $0x3c] sm:$0xf]
    %v855 = vunpack.c.l.b16 %v823
    %v856 = vunpack.c.l.b16 %v824
    %v857 = vunpack.c.l.b16 %v825
    %v858 = vunpack.c.l.b16 %v826
    %v859 = vunpack.c.l.b16 %v827
    %v860 = vunpack.c.l.b16 %v828
    %v861 = vunpack.c.l.b16 %v829
    %v862 = vunpack.c.l.b16 %v830
    %v863 = vunpack.c.l.b16 %v831
    %v864 = vunpack.c.l.b16 %v832
    %v865 = vunpack.c.l.b16 %v833
    %v866 = vunpack.c.l.b16 %v834
    %v867 = vunpack.c.l.b16 %v835
    %v868 = vunpack.c.l.b16 %v836
    %v869 = vunpack.c.l.b16 %v837
    %v870 = vunpack.c.l.b16 %v838
    %v871 = vpack.c.b16 %v856, %v855
    %v872 = vpack.c.b16 %v858, %v857
    %v873 = vpack.c.b16 %v860, %v859
    %v874 = vpack.c.b16 %v862, %v861
    %v875 = vpack.c.b16 %v864, %v863
    %v876 = vpack.c.b16 %v866, %v865
    %v877 = vpack.c.b16 %v868, %v867
    %v878 = vpack.c.b16 %v870, %v869
    %887 = vmatpush.bf16.msra.mxu0 %v878
    %888 = vmatpush.bf16.msra.mxu0 %v877
    %889 = vmatpush.bf16.msra.mxu0 %v876
    %890 = vmatpush.bf16.msra.mxu0 %v875
    %891 = vmatpush.bf16.msra.mxu0 %v874
    %892 = vmatpush.bf16.msra.mxu0 %v873
    %893 = vmatpush.bf16.msra.mxu0 %v872
    %894 = vmatpush.bf16.msra.mxu0 %v871
    %895 = vmatmul.bf16.gmra.mxu0 %v814
    %v896 = vpop.f32.mrf.mxu0
    %v897 = vadd.f32 0.0, %v896
    %v898 = vpop.f32.mrf.mxu0
    %v899 = vadd.f32 0.0, %v898
    %900 = vmatmul.bf16.gmra.mxu0 %v815
    %v901 = vpop.f32.mrf.mxu0
    %v902 = vadd.f32 0.0, %v901
    %v903 = vpop.f32.mrf.mxu0
    %v904 = vadd.f32 0.0, %v903
    %905 = vmatmul.bf16.gmra.mxu0 %v816
    %v906 = vpop.f32.mrf.mxu0
    %v907 = vadd.f32 0.0, %v906
    %v908 = vpop.f32.mrf.mxu0
    %v909 = vadd.f32 0.0, %v908
    %910 = vmatmul.bf16.gmra.mxu0 %v817
    %v911 = vpop.f32.mrf.mxu0
    %v912 = vadd.f32 0.0, %v911
    %v913 = vpop.f32.mrf.mxu0
    %v914 = vadd.f32 0.0, %v913
    %915 = vmatmul.bf16.gmra.mxu0 %v818
    %v916 = vpop.f32.mrf.mxu0
    %v917 = vadd.f32 0.0, %v916
    %v918 = vpop.f32.mrf.mxu0
    %v919 = vadd.f32 0.0, %v918
    %920 = vmatmul.bf16.gmra.mxu0 %v819
    %v921 = vpop.f32.mrf.mxu0
    %v922 = vadd.f32 0.0, %v921
    %v923 = vpop.f32.mrf.mxu0
    %v924 = vadd.f32 0.0, %v923
    %925 = vmatmul.bf16.gmra.mxu0 %v820
    %v926 = vpop.f32.mrf.mxu0
    %v927 = vadd.f32 0.0, %v926
    %v928 = vpop.f32.mrf.mxu0
    %v929 = vadd.f32 0.0, %v928
    %930 = vmatmul.bf16.gmra.mxu0 %v821
    %v931 = vpop.f32.mrf.mxu0
    %v932 = vadd.f32 0.0, %v931
    %v933 = vpop.f32.mrf.mxu0
    %v934 = vadd.f32 0.0, %v933
    %935 = vdwg.mxu0
    %v936 = vadd.f32 %v702, %v897
    %v937 = vadd.f32 %v703, %v899
    %v938 = vadd.f32 %v704, %v902
    %v939 = vadd.f32 %v705, %v904
    %v940 = vadd.f32 %v706, %v907
    %v941 = vadd.f32 %v707, %v909
    %v942 = vadd.f32 %v708, %v912
    %v943 = vadd.f32 %v709, %v914
    %v944 = vadd.f32 %v710, %v917
    %v945 = vadd.f32 %v711, %v919
    %v946 = vadd.f32 %v712, %v922
    %v947 = vadd.f32 %v713, %v924
    %v948 = vadd.f32 %v714, %v927
    %v949 = vadd.f32 %v715, %v929
    %v950 = vadd.f32 %v716, %v932
    %v951 = vadd.f32 %v717, %v934
    %952 = vset.pattern.permute.xlu0 4
    %953 = vperm.xlu0 %952, %v31
    %v954 = vpop.permute.xlu0 %953
    %955 = vset.pattern.permute.xlu0 4
    %956 = vperm.xlu0 %955, %v32
    %v957 = vpop.permute.xlu0 %956
    %958 = vset.pattern.permute.xlu0 4
    %959 = vperm.xlu0 %958, %v33
    %v960 = vpop.permute.xlu0 %959
    %961 = vset.pattern.permute.xlu0 4
    %962 = vperm.xlu0 %961, %v34
    %v963 = vpop.permute.xlu0 %962
    %964 = vset.pattern.permute.xlu0 4
    %965 = vperm.xlu0 %964, %v35
    %v966 = vpop.permute.xlu0 %965
    %967 = vset.pattern.permute.xlu0 4
    %968 = vperm.xlu0 %967, %v36
    %v969 = vpop.permute.xlu0 %968
    %970 = vset.pattern.permute.xlu0 4
    %971 = vperm.xlu0 %970, %v37
    %v972 = vpop.permute.xlu0 %971
    %973 = vset.pattern.permute.xlu0 4
    %974 = vperm.xlu0 %973, %v38
    %v975 = vpop.permute.xlu0 %974
    %976 = vset.pattern.permute.xlu0 4
    %977 = vperm.xlu0 %976, %v39
    %v978 = vpop.permute.xlu0 %977
    %979 = vset.pattern.permute.xlu0 4
    %980 = vperm.xlu0 %979, %v40
    %v981 = vpop.permute.xlu0 %980
    %982 = vset.pattern.permute.xlu0 4
    %983 = vperm.xlu0 %982, %v41
    %v984 = vpop.permute.xlu0 %983
    %985 = vset.pattern.permute.xlu0 4
    %986 = vperm.xlu0 %985, %v42
    %v987 = vpop.permute.xlu0 %986
    %988 = vset.pattern.permute.xlu0 4
    %989 = vperm.xlu0 %988, %v43
    %v990 = vpop.permute.xlu0 %989
    %991 = vset.pattern.permute.xlu0 4
    %992 = vperm.xlu0 %991, %v44
    %v993 = vpop.permute.xlu0 %992
    %994 = vset.pattern.permute.xlu0 4
    %995 = vperm.xlu0 %994, %v45
    %v996 = vpop.permute.xlu0 %995
    %997 = vset.pattern.permute.xlu0 4
    %998 = vperm.xlu0 %997, %v46
    %v999 = vpop.permute.xlu0 %998
    %vm1000 = vcmp.eq.s32.totalorder %v48, %v954
    %vm1001 = vcmp.eq.s32.totalorder %v48, %v957
    %vm1002 = vcmp.eq.s32.totalorder %v48, %v960
    %vm1003 = vcmp.eq.s32.totalorder %v48, %v963
    %vm1004 = vcmp.eq.s32.totalorder %v48, %v966
    %vm1005 = vcmp.eq.s32.totalorder %v48, %v969
    %vm1006 = vcmp.eq.s32.totalorder %v48, %v972
    %vm1007 = vcmp.eq.s32.totalorder %v48, %v975
    %vm1008 = vcmp.eq.s32.totalorder %v48, %v978
    %vm1009 = vcmp.eq.s32.totalorder %v48, %v981
    %vm1010 = vcmp.eq.s32.totalorder %v48, %v984
    %vm1011 = vcmp.eq.s32.totalorder %v48, %v987
    %vm1012 = vcmp.eq.s32.totalorder %v48, %v990
    %vm1013 = vcmp.eq.s32.totalorder %v48, %v993
    %vm1014 = vcmp.eq.s32.totalorder %v48, %v996
    %vm1015 = vcmp.eq.s32.totalorder %v48, %v999
    %v1016 = vsel %vm1000, 1, 0
    %v1017 = vsel %vm1001, 1, 0
    %v1018 = vsel %vm1002, 1, 0
    %v1019 = vsel %vm1003, 1, 0
    %v1020 = vsel %vm1004, 1, 0
    %v1021 = vsel %vm1005, 1, 0
    %v1022 = vsel %vm1006, 1, 0
    %v1023 = vsel %vm1007, 1, 0
    %v1024 = vsel %vm1008, 1, 0
    %v1025 = vsel %vm1009, 1, 0
    %v1026 = vsel %vm1010, 1, 0
    %v1027 = vsel %vm1011, 1, 0
    %v1028 = vsel %vm1012, 1, 0
    %v1029 = vsel %vm1013, 1, 0
    %v1030 = vsel %vm1014, 1, 0
    %v1031 = vsel %vm1015, 1, 0
    %v1032 = vcvt.s32.f32 %v1016
    %v1033 = vcvt.s32.f32 %v1017
    %v1034 = vcvt.s32.f32 %v1018
    %v1035 = vcvt.s32.f32 %v1019
    %v1036 = vcvt.s32.f32 %v1020
    %v1037 = vcvt.s32.f32 %v1021
    %v1038 = vcvt.s32.f32 %v1022
    %v1039 = vcvt.s32.f32 %v1023
    %v1040 = vcvt.s32.f32 %v1024
    %v1041 = vcvt.s32.f32 %v1025
    %v1042 = vcvt.s32.f32 %v1026
    %v1043 = vcvt.s32.f32 %v1027
    %v1044 = vcvt.s32.f32 %v1028
    %v1045 = vcvt.s32.f32 %v1029
    %v1046 = vcvt.s32.f32 %v1030
    %v1047 = vcvt.s32.f32 %v1031
    %v1048 = vpack.c.bf16 %v1033, %v1032
    %v1049 = vpack.c.bf16 %v1035, %v1034
    %v1050 = vpack.c.bf16 %v1037, %v1036
    %v1051 = vpack.c.bf16 %v1039, %v1038
    %v1052 = vpack.c.bf16 %v1041, %v1040
    %v1053 = vpack.c.bf16 %v1043, %v1042
    %v1054 = vpack.c.bf16 %v1045, %v1044
    %v1055 = vpack.c.bf16 %v1047, %v1046
    %s1056 = scalar_lea.vmem [#allocation2], 256
    %v1057 = vld [vmem:[%s1056] sm:$0xf]
    %v1058 = vld [vmem:[%s1056 + $0x4] sm:$0xf]
    %v1059 = vld [vmem:[%s1056 + $0x8] sm:$0xf]
    %v1060 = vld [vmem:[%s1056 + $0xc] sm:$0xf]
    %v1061 = vld [vmem:[%s1056 + $0x10] sm:$0xf]
    %v1062 = vld [vmem:[%s1056 + $0x14] sm:$0xf]
    %v1063 = vld [vmem:[%s1056 + $0x18] sm:$0xf]
    %v1064 = vld [vmem:[%s1056 + $0x1c] sm:$0xf]
    %v1065 = vld [vmem:[%s1056 + $0x20] sm:$0xf]
    %v1066 = vld [vmem:[%s1056 + $0x24] sm:$0xf]
    %v1067 = vld [vmem:[%s1056 + $0x28] sm:$0xf]
    %v1068 = vld [vmem:[%s1056 + $0x2c] sm:$0xf]
    %v1069 = vld [vmem:[%s1056 + $0x30] sm:$0xf]
    %v1070 = vld [vmem:[%s1056 + $0x34] sm:$0xf]
    %v1071 = vld [vmem:[%s1056 + $0x38] sm:$0xf]
    %v1072 = vld [vmem:[%s1056 + $0x3c] sm:$0xf]
    %v1089 = vunpack.c.l.b16 %v1057
    %v1090 = vunpack.c.l.b16 %v1058
    %v1091 = vunpack.c.l.b16 %v1059
    %v1092 = vunpack.c.l.b16 %v1060
    %v1093 = vunpack.c.l.b16 %v1061
    %v1094 = vunpack.c.l.b16 %v1062
    %v1095 = vunpack.c.l.b16 %v1063
    %v1096 = vunpack.c.l.b16 %v1064
    %v1097 = vunpack.c.l.b16 %v1065
    %v1098 = vunpack.c.l.b16 %v1066
    %v1099 = vunpack.c.l.b16 %v1067
    %v1100 = vunpack.c.l.b16 %v1068
    %v1101 = vunpack.c.l.b16 %v1069
    %v1102 = vunpack.c.l.b16 %v1070
    %v1103 = vunpack.c.l.b16 %v1071
    %v1104 = vunpack.c.l.b16 %v1072
    %v1105 = vpack.c.b16 %v1090, %v1089
    %v1106 = vpack.c.b16 %v1092, %v1091
    %v1107 = vpack.c.b16 %v1094, %v1093
    %v1108 = vpack.c.b16 %v1096, %v1095
    %v1109 = vpack.c.b16 %v1098, %v1097
    %v1110 = vpack.c.b16 %v1100, %v1099
    %v1111 = vpack.c.b16 %v1102, %v1101
    %v1112 = vpack.c.b16 %v1104, %v1103
    %1121 = vmatpush.bf16.msra.mxu0 %v1112
    %1122 = vmatpush.bf16.msra.mxu0 %v1111
    %1123 = vmatpush.bf16.msra.mxu0 %v1110
    %1124 = vmatpush.bf16.msra.mxu0 %v1109
    %1125 = vmatpush.bf16.msra.mxu0 %v1108
    %1126 = vmatpush.bf16.msra.mxu0 %v1107
    %1127 = vmatpush.bf16.msra.mxu0 %v1106
    %1128 = vmatpush.bf16.msra.mxu0 %v1105
    %1129 = vmatmul.bf16.gmra.mxu0 %v1048
    %v1130 = vpop.f32.mrf.mxu0
    %v1131 = vadd.f32 0.0, %v1130
    %v1132 = vpop.f32.mrf.mxu0
    %v1133 = vadd.f32 0.0, %v1132
    %1134 = vmatmul.bf16.gmra.mxu0 %v1049
    %v1135 = vpop.f32.mrf.mxu0
    %v1136 = vadd.f32 0.0, %v1135
    %v1137 = vpop.f32.mrf.mxu0
    %v1138 = vadd.f32 0.0, %v1137
    %1139 = vmatmul.bf16.gmra.mxu0 %v1050
    %v1140 = vpop.f32.mrf.mxu0
    %v1141 = vadd.f32 0.0, %v1140
    %v1142 = vpop.f32.mrf.mxu0
    %v1143 = vadd.f32 0.0, %v1142
    %1144 = vmatmul.bf16.gmra.mxu0 %v1051
    %v1145 = vpop.f32.mrf.mxu0
    %v1146 = vadd.f32 0.0, %v1145
    %v1147 = vpop.f32.mrf.mxu0
    %v1148 = vadd.f32 0.0, %v1147
    %1149 = vmatmul.bf16.gmra.mxu0 %v1052
    %v1150 = vpop.f32.mrf.mxu0
    %v1151 = vadd.f32 0.0, %v1150
    %v1152 = vpop.f32.mrf.mxu0
    %v1153 = vadd.f32 0.0, %v1152
    %1154 = vmatmul.bf16.gmra.mxu0 %v1053
    %v1155 = vpop.f32.mrf.mxu0
    %v1156 = vadd.f32 0.0, %v1155
    %v1157 = vpop.f32.mrf.mxu0
    %v1158 = vadd.f32 0.0, %v1157
    %1159 = vmatmul.bf16.gmra.mxu0 %v1054
    %v1160 = vpop.f32.mrf.mxu0
    %v1161 = vadd.f32 0.0, %v1160
    %v1162 = vpop.f32.mrf.mxu0
    %v1163 = vadd.f32 0.0, %v1162
    %1164 = vmatmul.bf16.gmra.mxu0 %v1055
    %v1165 = vpop.f32.mrf.mxu0
    %v1166 = vadd.f32 0.0, %v1165
    %v1167 = vpop.f32.mrf.mxu0
    %v1168 = vadd.f32 0.0, %v1167
    %1169 = vdwg.mxu0
    %v1170 = vadd.f32 %v936, %v1131
    %v1171 = vadd.f32 %v937, %v1133
    %v1172 = vadd.f32 %v938, %v1136
    %v1173 = vadd.f32 %v939, %v1138
    %v1174 = vadd.f32 %v940, %v1141
    %v1175 = vadd.f32 %v941, %v1143
    %v1176 = vadd.f32 %v942, %v1146
    %v1177 = vadd.f32 %v943, %v1148
    %v1178 = vadd.f32 %v944, %v1151
    %v1179 = vadd.f32 %v945, %v1153
    %v1180 = vadd.f32 %v946, %v1156
    %v1181 = vadd.f32 %v947, %v1158
    %v1182 = vadd.f32 %v948, %v1161
    %v1183 = vadd.f32 %v949, %v1163
    %v1184 = vadd.f32 %v950, %v1166
    %v1185 = vadd.f32 %v951, %v1168
    %v1186 = vld [vmem:[%s2] sm:$0x1]
    %v1188 = vperm.slane %v1186, 0
    %v1190 = vadd.f32 %v1170, %v1188
    %v1191 = vadd.f32 %v1171, %v1188
    %v1192 = vadd.f32 %v1172, %v1188
    %v1193 = vadd.f32 %v1173, %v1188
    %v1194 = vadd.f32 %v1174, %v1188
    %v1195 = vadd.f32 %v1175, %v1188
    %v1196 = vadd.f32 %v1176, %v1188
    %v1197 = vadd.f32 %v1177, %v1188
    %v1198 = vadd.f32 %v1178, %v1188
    %v1199 = vadd.f32 %v1179, %v1188
    %v1200 = vadd.f32 %v1180, %v1188
    %v1201 = vadd.f32 %v1181, %v1188
    %v1202 = vadd.f32 %v1182, %v1188
    %v1203 = vadd.f32 %v1183, %v1188
    %v1204 = vadd.f32 %v1184, %v1188
    %v1205 = vadd.f32 %v1185, %v1188
    %1206 = vst [vmem:[#allocation5] sm:$0xff] %v1190
    %1207 = vst [vmem:[#allocation5 + $0x8] sm:$0xff] %v1191
    %1208 = vst [vmem:[#allocation5 + $0x10] sm:$0xff] %v1192
    %1209 = vst [vmem:[#allocation5 + $0x18] sm:$0xff] %v1193
    %1210 = vst [vmem:[#allocation5 + $0x20] sm:$0xff] %v1194
    %1211 = vst [vmem:[#allocation5 + $0x28] sm:$0xff] %v1195
    %1212 = vst [vmem:[#allocation5 + $0x30] sm:$0xff] %v1196
    %1213 = vst [vmem:[#allocation5 + $0x38] sm:$0xff] %v1197
    %1214 = vst [vmem:[#allocation5 + $0x40] sm:$0xff] %v1198
    %1215 = vst [vmem:[#allocation5 + $0x48] sm:$0xff] %v1199
    %1216 = vst [vmem:[#allocation5 + $0x50] sm:$0xff] %v1200
    %1217 = vst [vmem:[#allocation5 + $0x58] sm:$0xff] %v1201
    %1218 = vst [vmem:[#allocation5 + $0x60] sm:$0xff] %v1202
    %1219 = vst [vmem:[#allocation5 + $0x68] sm:$0xff] %v1203
    %1220 = vst [vmem:[#allocation5 + $0x70] sm:$0xff] %v1204
    %1221 = vst [vmem:[#allocation5 + $0x78] sm:$0xff] %v1205
    // Predicated region
    $region18: #{tpu_custom_call.1} parent=1 // pred_check
      _
    $region19: #{tpu_custom_call.1} parent=1 // pred_check_branch
      %1223 = sbr.rel (0) target = $region21
    $region20: #{tpu_custom_call.1} parent=1 // pred_region
      %1225 = vsyncadd [#allocation4], 0
      %s1226 = sshll.u32 [#allocation5], 4
      %s1227 = int_to_ptr.vmem [resolvable:$true] %s1226
      %s1228 = sshll.u32 %s3, 4
      %s1229 = int_to_ptr.hbm [resolvable:$true] %s1228
      %1234 = dma.vmem_to_hbm [thread:$0]  %s1227, 2048, %s1229, [#allocation4], 128, 128, 8
    $region21: #{tpu_custom_call.1} parent=1 // pred_fallthru
      _
    // Predicated region
    $region22: #{tpu_custom_call.1} parent=1 // pred_check
      _
    $region23: #{tpu_custom_call.1} parent=1 // pred_check_branch
      %1236 = sbr.rel (0) target = $region25
    $region24: #{tpu_custom_call.1} parent=1 // pred_region
      %1238 = dma.done [#allocation4], 2048
    $region25: #{tpu_custom_call.1} parent=1 // pred_fallthru
      _
    %1239 = vsyncpa [#allocation3], 1
    %1240 = vsyncpa [#allocation4], 1

</llo_original>
